<compile_context>
chip_gen: v7x
topology: tpu7x:2x2x1
jax: 0.10.0
libtpu: 0.0.40
codegen_flags: <defaults>
</compile_context>

<pallas_src>
import jax
import jax.numpy as jnp
from jax.experimental import pallas as pl
from jax.experimental.pallas import tpu as pltpu


def _round_up(x: int, m: int) -> int:
    return ((x + m - 1) // m) * m


def _pick_tile(dim: int, cap: int, unit: int) -> int:
    """Largest multiple of `unit` <= cap that divides round_up(dim, unit).

    Falls back to `cap` (accepting some zero-padding) when divisibility is
    poor, to avoid degenerate tiny tiles.
    """
    padded = _round_up(dim, unit)
    if padded <= cap:
        return padded
    best = unit
    t = unit
    while t <= cap:
        if padded % t == 0:
            best = t
        t += unit
    if best * 2 < cap:          # poor divisibility -> pad instead of tiny tiles
        best = cap
    return best


def _complex_linear_kernel(x_ref, wre_ref, wim_ref, b_ref, o_ref,
                           acc_re, acc_im):
    # x_ref  : (2, TM, TK)  [0]=x_re tile, [1]=x_im tile   (compute dtype)
    # wre_ref: (TK, TN)     real-weight tile               (compute dtype)
    # wim_ref: (TK, TN)     imag-weight tile               (compute dtype)
    # b_ref  : (2, 1,  TN)  [0]=b_re-b_im, [1]=b_re+b_im   (f32)
    # o_ref  : (2, TM, TN)  [0]=real out,  [1]=imag out
    # acc_re, acc_im: (TM, TN) f32 scratch accumulators (resident across K)
    k = pl.program_id(2)
    nk = pl.num_programs(2)

    @pl.when(k == 0)
    def _():
        acc_re[...] = jnp.zeros_like(acc_re)
        acc_im[...] = jnp.zeros_like(acc_im)

    tm = acc_re.shape[0]
    x = x_ref[...]                               # (2, TM, TK)
    x2 = x.reshape(2 * tm, x.shape[-1])          # [x_re ; x_im]  (2*TM, TK)

    # Two fused MXU calls (2*TM rows each) instead of four small ones.
    p_r = jnp.dot(x2, wre_ref[...], preferred_element_type=jnp.float32)
    p_i = jnp.dot(x2, wim_ref[...], preferred_element_type=jnp.float32)

    acc_re[...] += p_r[:tm] - p_i[tm:]           # x_re@w_re - x_im@w_im
    acc_im[...] += p_r[tm:] + p_i[:tm]           # x_im@w_re + x_re@w_im

    @pl.when(k == nk - 1)
    def _():
        o_ref[0] = (acc_re[...] + b_ref[0]).astype(o_ref.dtype)
        o_ref[1] = (acc_im[...] + b_ref[1]).astype(o_ref.dtype)


def complex_linear_planar(x, w_re, w_im, b_re=None, b_im=None, *,
                          tm=None, tn=None, tk=None, use_bf16=True):
    """Planar ComplexLinear forward (no (...,2) interleave transposes).

    x   : (2, B, F_in) — plane 0 = real, plane 1 = imag.
    w_* : (F_in, F_out) — pre-transposed vs. torch's (out, in) layout.
    b_* : (F_out,) or None (bias=False).
    returns (2, B, F_out).
    """
    two, B, F_in = x.shape
    assert two == 2, "leading axis of planar x must be [real, imag]"
    F_out = w_re.shape[1]
    out_dtype = x.dtype

    cdt = jnp.bfloat16 if use_bf16 else x.dtype      # MXU compute dtype
    sub = 16 if cdt == jnp.bfloat16 else 8           # sublane packing rows
    csize = jnp.dtype(cdt).itemsize
    osize = jnp.dtype(out_dtype).itemsize

    tn_auto = tn is None
    tm = _pick_tile(B, 512, sub) if tm is None else _round_up(int(tm), sub)
    tk = _pick_tile(F_in, 1024, 128) if tk is None else _round_up(int(tk), 128)
    tn = _pick_tile(F_out, 512, 128) if tn is None else _round_up(int(tn), 128)

    Bp = _round_up(B, tm)
    Kp = _round_up(F_in, tk)
    Np = _round_up(F_out, tn)

    # v7x has 2 TensorCores: make sure the parallel (M,N) grid has >=2 blocks
    # when the batch fits a single M tile, by splitting N (auto-tiling only).
    if tn_auto and (Bp // tm) * (Np // tn) < 2 and Np >= 256:
        t, best = 128, 128
        while t <= Np // 2:
            if Np % t == 0:
                best = t
            t += 128
        tn = best

    # Cast to the MXU dtype; pads are guarded so aligned shapes do no copies.
    xp = x.astype(cdt)
    if (Bp, Kp) != (B, F_in):
        xp = jnp.pad(xp, ((0, 0), (0, Bp - B), (0, Kp - F_in)))
    wre = w_re.astype(cdt)
    wim = w_im.astype(cdt)
    if (Kp, Np) != (F_in, F_out):
        wre = jnp.pad(wre, ((0, Kp - F_in), (0, Np - F_out)))
        wim = jnp.pad(wim, ((0, Kp - F_in), (0, Np - F_out)))

    if b_re is None:
        b_re = jnp.zeros((F_out,), jnp.float32)
    if b_im is None:
        b_im = jnp.zeros((F_out,), jnp.float32)
    # Pre-combined biases, applied once at the K-finalize step (in f32).
    bp = jnp.stack((b_re - b_im, b_re + b_im), axis=0)
    bp = bp.astype(jnp.float32).reshape(2, 1, F_out)
    if Np != F_out:
        bp = jnp.pad(bp, ((0, 0), (0, 0), (0, Np - F_out)))

    grid = (Bp // tm, Np // tn, Kp // tk)

    # VMEM budget: double-buffered pipeline tiles + f32 accumulators.
    buf_bytes = 2 * (2 * tm * tk * csize        # x block
                     + 2 * tk * tn * csize      # w_re + w_im blocks
                     + 2 * 1 * tn * 4           # bias block
                     + 2 * tm * tn * osize      # out block
                     ) + 2 * tm * tn * 4        # acc_re + acc_im scratch
    vmem_limit = int(1.4 * buf_bytes) + (2 << 20)

    flops = 8 * Bp * Kp * Np                    # 2 dots of (2B, K) x (K, N)
    bytes_accessed = int(2 * Bp * Kp * csize + 2 * Kp * Np * csize
                         + 2 * Bp * Np * osize + 2 * Np * 4)

    out = pl.pallas_call(
        _complex_linear_kernel,
        out_shape=jax.ShapeDtypeStruct((2, Bp, Np), out_dtype),
        grid_spec=pltpu.PrefetchScalarGridSpec(
            num_scalar_prefetch=0,
            grid=grid,
            in_specs=[
                pl.BlockSpec((2, tm, tk), lambda i, j, k: (0, i, k)),  # x
                pl.BlockSpec((tk, tn), lambda i, j, k: (k, j)),        # w_re
                pl.BlockSpec((tk, tn), lambda i, j, k: (k, j)),        # w_im
                pl.BlockSpec((2, 1, tn), lambda i, j, k: (0, 0, j)),   # bias
            ],
            out_specs=pl.BlockSpec((2, tm, tn), lambda i, j, k: (0, i, j)),
            scratch_shapes=[
                pltpu.VMEM((tm, tn), jnp.float32),   # acc_re
                pltpu.VMEM((tm, tn), jnp.float32),   # acc_im
            ],
        ),
        compiler_params=pltpu.CompilerParams(
            dimension_semantics=("parallel", "parallel", "arbitrary"),
            vmem_limit_bytes=vmem_limit,
        ),
        cost_estimate=pl.CostEstimate(
            flops=flops, transcendentals=0, bytes_accessed=bytes_accessed),
    )(xp, wre, wim, bp)

    return out[:, :B, :F_out]                    # strip padding, stay planar


def complex_linear(x, w_re, w_im, b_re=None, b_im=None, **kwargs):
    """ComplexLinear forward with the torch layout.

    x : (B, F_in, 2) with last axis [real, imag]; returns (B, F_out, 2).
    Prefer complex_linear_planar when the caller can use planar layout
    (avoids the lane-sparse interleave transposes at the boundary).
    """
    assert x.shape[-1] == 2, "last axis of x must hold [real, imag]"
    xp = jnp.moveaxis(x, -1, 0)                       # (2, B, F_in)
    out = complex_linear_planar(xp, w_re, w_im, b_re, b_im, **kwargs)
    return jnp.moveaxis(out, 0, -1)                   # (B, F_out, 2)


def _reference(x, w_re, w_im, b_re, b_im):
    x_re, x_im = x[..., 0], x[..., 1]
    real = (x_re @ w_re + b_re) - (x_im @ w_im + b_im)
    imag = (x_im @ w_re + b_re) + (x_re @ w_im + b_im)
    return jnp.stack((real, imag), axis=-1)


def _make_params(key, in_features, out_features):
    k_wr, k_wi, k_br, k_bi = jax.random.split(key, 4)
    bound = 1.0 / (in_features ** 0.5)
    w_re = jax.random.uniform(k_wr, (in_features, out_features),
                              jnp.float32, -bound, bound)
    w_im = jax.random.uniform(k_wi, (in_features, out_features),
                              jnp.float32, -bound, bound)
    b_re = jax.random.uniform(k_br, (out_features,), jnp.float32, -bound, bound)
    b_im = jax.random.uniform(k_bi, (out_features,), jnp.float32, -bound, bound)
    return w_re, w_im, b_re, b_im


if __name__ == "__main__":
    key = jax.random.PRNGKey(0)
    k1, k2, k3, k4, k5, k6 = jax.random.split(key, 6)

    # Case 1: the module's small demo sizes, default bf16 MXU path.
    B, F_in, F_out = 8, 32, 32
    w_re, w_im, b_re, b_im = _make_params(k1, F_in, F_out)
    x = jax.random.normal(k2, (B, F_in, 2), jnp.float32)
    out = jax.block_until_ready(complex_linear(x, w_re, w_im, b_re, b_im))
    ref = _reference(x, w_re, w_im, b_re, b_im)
    assert out.shape == (B, F_out, 2), out.shape
    assert jnp.allclose(out, ref, atol=5e-2, rtol=5e-2), "case 1 (bf16) mismatch"

    # Case 2: non-aligned sizes, explicit small tiles, f32 path -> exercises a
    # multi-block (M, N, K) grid, padding, K-accumulation and the finalize
    # bias path at tight tolerance.
    B2, F_in2, F_out2 = 12, 256, 160
    w_re2, w_im2, b_re2, b_im2 = _make_params(k3, F_in2, F_out2)
    x2 = jax.random.normal(k4, (B2, F_in2, 2), jnp.float32)
    out2 = jax.block_until_ready(
        complex_linear(x2, w_re2, w_im2, b_re2, b_im2,
                       tm=8, tn=128, tk=128, use_bf16=False))
    ref2 = _reference(x2, w_re2, w_im2, b_re2, b_im2)
    assert out2.shape == (B2, F_out2, 2), out2.shape
    assert jnp.allclose(out2, ref2, atol=1e-4, rtol=1e-4), "case 2 (f32) mismatch"

    # Case 3: planar I/O, auto-tiling, and the >=2-parallel-block split for
    # small batches (bf16 path).
    B3, F_in3, F_out3 = 24, 384, 256
    w_re3, w_im3, b_re3, b_im3 = _make_params(k5, F_in3, F_out3)
    x3 = jax.random.normal(k6, (2, B3, F_in3), jnp.float32)   # planar input
    out3 = jax.block_until_ready(
        complex_linear_planar(x3, w_re3, w_im3, b_re3, b_im3))
    ref3 = _reference(jnp.moveaxis(x3, 0, -1), w_re3, w_im3, b_re3, b_im3)
    assert out3.shape == (2, B3, F_out3), out3.shape
    assert jnp.allclose(jnp.moveaxis(out3, 0, -1), ref3,
                        atol=5e-2, rtol=5e-2), "case 3 (planar/bf16) mismatch"

    print("KERNEL_OK")
</pallas_src>

<mosaic_0001>
module attributes {stable_mosaic.version = 11 : i64} {
  func.func @_complex_linear_kernel(%arg0: i32, %arg1: i32, %arg2: i32, %arg3: memref<2x16x128xbf16, #tpu.memory_space<vmem>>, %arg4: memref<128x128xbf16, #tpu.memory_space<vmem>>, %arg5: memref<128x128xbf16, #tpu.memory_space<vmem>>, %arg6: memref<2x1x128xf32, #tpu.memory_space<vmem>>, %arg7: memref<2x16x128xf32, #tpu.memory_space<vmem>>, %arg8: memref<16x128xf32, #tpu.memory_space<vmem>>, %arg9: memref<16x128xf32, #tpu.memory_space<vmem>>) attributes {dimension_semantics = [#tpu.dimension_semantics<parallel>, #tpu.dimension_semantics<parallel>, #tpu.dimension_semantics<arbitrary>], iteration_bounds = array<i64: 1, 1, 1>, scalar_prefetch = 0 : i64, scratch_operands = 2 : i64, tpu.core_type = #tpu.core_type<tc>, window_params = [{transform_indices = @transform_0, window_bounds = array<i64: 2, 16, 128>}, {transform_indices = @transform_1, window_bounds = array<i64: 128, 128>}, {transform_indices = @transform_2, window_bounds = array<i64: 128, 128>}, {transform_indices = @transform_3, window_bounds = array<i64: 2, 1, 128>}, {transform_indices = @transform_4, window_bounds = array<i64: 2, 16, 128>}]} {
    %c0_i32 = arith.constant 0 : i32
    %0 = arith.cmpi eq, %arg2, %c0_i32 : i32
    %1 = arith.extui %0 : i1 to i32
    %c0_i32_0 = arith.constant 0 : i32
    %2 = arith.cmpi ne, %1, %c0_i32_0 : i32
    scf.if %2 {
      %cst_18 = arith.constant 0.000000e+00 : f32
      %24 = vector.broadcast %cst_18 : f32 to vector<16x128xf32>
      %c0_19 = arith.constant 0 : index
      %c0_20 = arith.constant 0 : index
      %25 = vector.load %arg8[%c0_19, %c0_20] : memref<16x128xf32, #tpu.memory_space<vmem>>, vector<16x128xf32>
      tpu.vector_store %arg8[%c0_19, %c0_20], %24 {strides = array<i32>} : memref<16x128xf32, #tpu.memory_space<vmem>>, vector<16x128xf32>,
      %cst_21 = arith.constant 0.000000e+00 : f32
      %26 = vector.broadcast %cst_21 : f32 to vector<16x128xf32>
      %c0_22 = arith.constant 0 : index
      %c0_23 = arith.constant 0 : index
      %27 = vector.load %arg9[%c0_22, %c0_23] : memref<16x128xf32, #tpu.memory_space<vmem>>, vector<16x128xf32>
      tpu.vector_store %arg9[%c0_22, %c0_23], %26 {strides = array<i32>} : memref<16x128xf32, #tpu.memory_space<vmem>>, vector<16x128xf32>,
    } else {
    }
    %c0 = arith.constant 0 : index
    %c0_1 = arith.constant 0 : index
    %c0_2 = arith.constant 0 : index
    %3 = vector.load %arg3[%c0, %c0_1, %c0_2] : memref<2x16x128xbf16, #tpu.memory_space<vmem>>, vector<2x16x128xbf16>
    %4 = vector.shape_cast %3 : vector<2x16x128xbf16> to vector<32x128xbf16>
    %c0_3 = arith.constant 0 : index
    %c0_4 = arith.constant 0 : index
    %5 = vector.load %arg4[%c0_3, %c0_4] : memref<128x128xbf16, #tpu.memory_space<vmem>>, vector<128x128xbf16>
    %cst = arith.constant dense<0.000000e+00> : vector<32x128xf32>
    %6 = tpu.matmul %4, %5, %cst {dimension_numbers = #tpu.dot_dimension_numbers<[1], [0], [0], [1], [0, 0, 1, 1], [], []>} : vector<32x128xbf16>, vector<128x128xbf16>, vector<32x128xf32> -> vector<32x128xf32>
    %c0_5 = arith.constant 0 : index
    %c0_6 = arith.constant 0 : index
    %7 = vector.load %arg5[%c0_5, %c0_6] : memref<128x128xbf16, #tpu.memory_space<vmem>>, vector<128x128xbf16>
    %cst_7 = arith.constant dense<0.000000e+00> : vector<32x128xf32>
    %8 = tpu.matmul %4, %7, %cst_7 {dimension_numbers = #tpu.dot_dimension_numbers<[1], [0], [0], [1], [0, 0, 1, 1], [], []>} : vector<32x128xbf16>, vector<128x128xbf16>, vector<32x128xf32> -> vector<32x128xf32>
    %c0_8 = arith.constant 0 : index
    %c0_9 = arith.constant 0 : index
    %9 = vector.load %arg8[%c0_8, %c0_9] : memref<16x128xf32, #tpu.memory_space<vmem>>, vector<16x128xf32>
    %10 = vector.extract_strided_slice %6 {offsets = [0, 0], sizes = [16, 128], strides = [1, 1]} : vector<32x128xf32> to vector<16x128xf32>
    %11 = vector.extract_strided_slice %8 {offsets = [16, 0], sizes = [16, 128], strides = [1, 1]} : vector<32x128xf32> to vector<16x128xf32>
    %12 = arith.subf %10, %11 : vector<16x128xf32>
    %13 = arith.addf %9, %12 : vector<16x128xf32>
    %c0_10 = arith.constant 0 : index
    %c0_11 = arith.constant 0 : index
    %14 = vector.load %arg8[%c0_10, %c0_11] : memref<16x128xf32, #tpu.memory_space<vmem>>, vector<16x128xf32>
    tpu.vector_store %arg8[%c0_10, %c0_11], %13 {strides = array<i32>} : memref<16x128xf32, #tpu.memory_space<vmem>>, vector<16x128xf32>,
    %c0_12 = arith.constant 0 : index
    %c0_13 = arith.constant 0 : index
    %15 = vector.load %arg9[%c0_12, %c0_13] : memref<16x128xf32, #tpu.memory_space<vmem>>, vector<16x128xf32>
    %16 = vector.extract_strided_slice %6 {offsets = [16, 0], sizes = [16, 128], strides = [1, 1]} : vector<32x128xf32> to vector<16x128xf32>
    %17 = vector.extract_strided_slice %8 {offsets = [0, 0], sizes = [16, 128], strides = [1, 1]} : vector<32x128xf32> to vector<16x128xf32>
    %18 = arith.addf %16, %17 : vector<16x128xf32>
    %19 = arith.addf %15, %18 : vector<16x128xf32>
    %c0_14 = arith.constant 0 : index
    %c0_15 = arith.constant 0 : index
    %20 = vector.load %arg9[%c0_14, %c0_15] : memref<16x128xf32, #tpu.memory_space<vmem>>, vector<16x128xf32>
    tpu.vector_store %arg9[%c0_14, %c0_15], %19 {strides = array<i32>} : memref<16x128xf32, #tpu.memory_space<vmem>>, vector<16x128xf32>,
    %c0_i32_16 = arith.constant 0 : i32
    %21 = arith.cmpi eq, %arg2, %c0_i32_16 : i32
    %22 = arith.extui %21 : i1 to i32
    %c0_i32_17 = arith.constant 0 : i32
    %23 = arith.cmpi ne, %22, %c0_i32_17 : i32
    scf.if %23 {
      %c0_18 = arith.constant 0 : index
      %c0_19 = arith.constant 0 : index
      %24 = vector.load %arg8[%c0_18, %c0_19] : memref<16x128xf32, #tpu.memory_space<vmem>>, vector<16x128xf32>
      %c0_20 = arith.constant 0 : index
      %c0_21 = arith.constant 0 : index
      %c0_22 = arith.constant 0 : index
      %25 = vector.load %arg6[%c0_20, %c0_21, %c0_22] : memref<2x1x128xf32, #tpu.memory_space<vmem>>, vector<1x1x128xf32>
      %26 = vector.shape_cast %25 : vector<1x1x128xf32> to vector<1x128xf32>
      %27 = vector.broadcast %26 : vector<1x128xf32> to vector<16x128xf32>
      %28 = arith.addf %24, %27 : vector<16x128xf32>
      %c0_23 = arith.constant 0 : index
      %c0_24 = arith.constant 0 : index
      %c0_25 = arith.constant 0 : index
      %29 = vector.load %arg7[%c0_23, %c0_24, %c0_25] : memref<2x16x128xf32, #tpu.memory_space<vmem>>, vector<1x16x128xf32>
      %30 = vector.shape_cast %29 : vector<1x16x128xf32> to vector<16x128xf32>
      %31 = vector.shape_cast %28 : vector<16x128xf32> to vector<1x16x128xf32>
      tpu.vector_store %arg7[%c0_23, %c0_24, %c0_25], %31 {strides = array<i32>} : memref<2x16x128xf32, #tpu.memory_space<vmem>>, vector<1x16x128xf32>,
      %c0_26 = arith.constant 0 : index
      %c0_27 = arith.constant 0 : index
      %32 = vector.load %arg9[%c0_26, %c0_27] : memref<16x128xf32, #tpu.memory_space<vmem>>, vector<16x128xf32>
      %c1 = arith.constant 1 : index
      %c0_28 = arith.constant 0 : index
      %c0_29 = arith.constant 0 : index
      %33 = vector.load %arg6[%c1, %c0_28, %c0_29] : memref<2x1x128xf32, #tpu.memory_space<vmem>>, vector<1x1x128xf32>
      %34 = vector.shape_cast %33 : vector<1x1x128xf32> to vector<1x128xf32>
      %35 = vector.broadcast %34 : vector<1x128xf32> to vector<16x128xf32>
      %36 = arith.addf %32, %35 : vector<16x128xf32>
      %c1_30 = arith.constant 1 : index
      %c0_31 = arith.constant 0 : index
      %c0_32 = arith.constant 0 : index
      %37 = vector.load %arg7[%c1_30, %c0_31, %c0_32] : memref<2x16x128xf32, #tpu.memory_space<vmem>>, vector<1x16x128xf32>
      %38 = vector.shape_cast %37 : vector<1x16x128xf32> to vector<16x128xf32>
      %39 = vector.shape_cast %36 : vector<16x128xf32> to vector<1x16x128xf32>
      tpu.vector_store %arg7[%c1_30, %c0_31, %c0_32], %39 {strides = array<i32>} : memref<2x16x128xf32, #tpu.memory_space<vmem>>, vector<1x16x128xf32>,
    } else {
    }
    return
  }
  func.func @transform_0(%arg0: i32, %arg1: i32, %arg2: i32) -> (i32, i32, i32) {
    %c0_i32 = arith.constant 0 : i32
    %c0_i32_0 = arith.constant 0 : i32
    return %c0_i32, %arg0, %arg2 : i32, i32, i32
  }
  func.func @transform_1(%arg0: i32, %arg1: i32, %arg2: i32) -> (i32, i32) {
    %c0_i32 = arith.constant 0 : i32
    return %arg2, %arg1 : i32, i32
  }
  func.func @transform_2(%arg0: i32, %arg1: i32, %arg2: i32) -> (i32, i32) {
    %c0_i32 = arith.constant 0 : i32
    return %arg2, %arg1 : i32, i32
  }
  func.func @transform_3(%arg0: i32, %arg1: i32, %arg2: i32) -> (i32, i32, i32) {
    %c0_i32 = arith.constant 0 : i32
    %c0_i32_0 = arith.constant 0 : i32
    %c0_i32_1 = arith.constant 0 : i32
    return %c0_i32, %c0_i32_0, %arg1 : i32, i32, i32
  }
  func.func @transform_4(%arg0: i32, %arg1: i32, %arg2: i32) -> (i32, i32, i32) {
    %c0_i32 = arith.constant 0 : i32
    %c0_i32_0 = arith.constant 0 : i32
    return %c0_i32, %arg0, %arg1 : i32, i32, i32
  }
}

</mosaic_0001>

<llo_original>
// kernel: tpu_custom_call.1
$region0: #{tpu_custom_call.1}
  #allocation0 [shape = 'u32[]', space=smem, size = 0x4, offset = 0x4, fixed_abs, tag = 'smem constant byte address 0x4 - core index']
  #allocation1 [shape = 'u32[144,128]{1,0:T(1,128)}', space=vmem, size = 0x12000, scoped, tag = 'internal scratch']
  #allocation2 [shape = 'f32[16,128]{1,0:T(8,128)}', space=vmem, size = 0x2000, scoped, tag = 'scratch operand']
  #allocation3 [shape = 'f32[16,128]{1,0:T(8,128)}', space=vmem, size = 0x2000, scoped, tag = 'scratch operand']
  %s0 = inlined_call_operand.hbm [shape: bf16[2,16,128], index: 0, kind: input, shape index: {}]
  %s1 = inlined_call_operand.hbm [shape: bf16[128,128], index: 1, kind: input, shape index: {}]
  %s2 = inlined_call_operand.hbm [shape: bf16[128,128], index: 2, kind: input, shape index: {}]
  %s3 = inlined_call_operand.vmem [shape: f32[2,1,128], index: 3, kind: input, shape index: {}]
  %s4 = inlined_call_operand.hbm [shape: f32[2,16,128], index: 4, kind: output, shape index: {}]
  %s5 = sld [smem:[#allocation0]]
  $region46: #{tpu_custom_call.1} parent=0
    _
  %s7 = ssub.s32 1, %s5
  %s8 = scalar_select 0, %s7, %s5
  $region1: #{tpu_custom_call.1} parent=0
    #allocation4 [shape = 'u8[8192]{0}', space=vmem, size = 0x2000, scoped, tag = 'input window, operand 0, single buffered']
    #allocation5 [shape = 's32[1]{0}', space=sflag, size = 0x4, scoped, tag = 'scoped memory for tpu_custom_call.1']
    #allocation6 [shape = 's32[1]{0}', space=sflag, size = 0x4, scoped, tag = 'scoped memory for tpu_custom_call.1']
    #allocation7 [shape = 'u8[32768]{0}', space=vmem, size = 0x8000, scoped, tag = 'input window, operand 1, single buffered']
    #allocation8 [shape = 's32[1]{0}', space=sflag, size = 0x4, scoped, tag = 'scoped memory for tpu_custom_call.1']
    #allocation9 [shape = 'u8[32768]{0}', space=vmem, size = 0x8000, scoped, tag = 'input window, operand 2, single buffered']
    #allocation10 [shape = 'u8[16384]{0}', space=vmem, size = 0x4000, scoped, tag = 'output window, operand 0, single buffered']
    %9 = vsyncpa [#allocation5], 0
    %10 = vsyncpa [#allocation8], 0
    %11 = vsyncpa [#allocation6], 0
    // Predicated region
    $region2: #{tpu_custom_call.1} parent=1 // pred_check
      _
    $region3: #{tpu_custom_call.1} parent=1 // pred_check_branch
      %13 = sbr.rel (0) target = $region5
    $region4: #{tpu_custom_call.1} parent=1 // pred_region
      %s15 = ssub.s32 256, 256
      %16 = vsyncadd [#allocation5], %s15
      %s17 = sshll.u32 [#allocation4], 4
      %s18 = int_to_ptr.vmem [resolvable:$true] %s17
      %23 = dma.hbm_to_vmem [thread:$0]  %s0, 256, %s18, [#allocation5], 64, 64, 4
    $region5: #{tpu_custom_call.1} parent=1 // pred_fallthru
      _
    // Predicated region
    $region6: #{tpu_custom_call.1} parent=1 // pred_check
      _
    $region7: #{tpu_custom_call.1} parent=1 // pred_check_branch
      %25 = sbr.rel (0) target = $region9
    $region8: #{tpu_custom_call.1} parent=1 // pred_region
      %s27 = ssub.s32 1024, 1024
      %28 = vsyncadd [#allocation8], %s27
      %s29 = sshll.u32 [#allocation7], 4
      %s30 = int_to_ptr.vmem [resolvable:$true] %s29
      %35 = dma.hbm_to_vmem [thread:$0]  %s1, 1024, %s30, [#allocation8], 64, 64, 4
    $region9: #{tpu_custom_call.1} parent=1 // pred_fallthru
      _
    // Predicated region
    $region10: #{tpu_custom_call.1} parent=1 // pred_check
      _
    $region11: #{tpu_custom_call.1} parent=1 // pred_check_branch
      %37 = sbr.rel (0) target = $region13
    $region12: #{tpu_custom_call.1} parent=1 // pred_region
      %s39 = ssub.s32 1024, 1024
      %40 = vsyncadd [#allocation8], %s39
      %s41 = sshll.u32 [#allocation9], 4
      %s42 = int_to_ptr.vmem [resolvable:$true] %s41
      %47 = dma.hbm_to_vmem [thread:$0]  %s2, 1024, %s42, [#allocation8], 64, 64, 4
    $region13: #{tpu_custom_call.1} parent=1 // pred_fallthru
      _
    // Predicated region
    $region14: #{tpu_custom_call.1} parent=1 // pred_check
      _
    $region15: #{tpu_custom_call.1} parent=1 // pred_check_branch
      %49 = sbr.rel (0) target = $region17
    $region16: #{tpu_custom_call.1} parent=1 // pred_region
      _
    $region17: #{tpu_custom_call.1} parent=1 // pred_fallthru
      _
    // Predicated region
    $region18: #{tpu_custom_call.1} parent=1 // pred_check
      _
    $region19: #{tpu_custom_call.1} parent=1 // pred_check_branch
      %51 = sbr.rel (0) target = $region21
    $region20: #{tpu_custom_call.1} parent=1 // pred_region
      %52 = dma.done [#allocation5], 256
    $region21: #{tpu_custom_call.1} parent=1 // pred_fallthru
      _
    // Predicated region
    $region22: #{tpu_custom_call.1} parent=1 // pred_check
      _
    $region23: #{tpu_custom_call.1} parent=1 // pred_check_branch
      %54 = sbr.rel (0) target = $region25
    $region24: #{tpu_custom_call.1} parent=1 // pred_region
      %55 = dma.done [#allocation8], 1024
    $region25: #{tpu_custom_call.1} parent=1 // pred_fallthru
      _
    // Predicated region
    $region26: #{tpu_custom_call.1} parent=1 // pred_check
      _
    $region27: #{tpu_custom_call.1} parent=1 // pred_check_branch
      %57 = sbr.rel (0) target = $region29
    $region28: #{tpu_custom_call.1} parent=1 // pred_region
      %58 = dma.done [#allocation8], 1024
    $region29: #{tpu_custom_call.1} parent=1 // pred_fallthru
      _
    %p60 = scmp.eq.s32.totalorder 0, 0
    // Predicated region
    $region30: #{tpu_custom_call.1} parent=1 // pred_check
      %p61 = pneg %p60
    $region31: #{tpu_custom_call.1} parent=1 // pred_check_branch
      %63 = sbr.rel (%p61) target = $region33
    $region32: #{tpu_custom_call.1} parent=1 // pred_region
      %64 = vst [vmem:[#allocation2] sm:$0xff] 0.0
      %65 = vst [vmem:[#allocation2 + $0x8] sm:$0xff] 0.0
      %66 = vst [vmem:[#allocation3] sm:$0xff] 0.0
      %67 = vst [vmem:[#allocation3 + $0x8] sm:$0xff] 0.0
    $region33: #{tpu_custom_call.1} parent=1 // pred_fallthru
      _
    %v68 = vld [vmem:[#allocation4] sm:$0xf]
    %v69 = vld [vmem:[#allocation4 + $0x4] sm:$0xf]
    %v70 = vld [vmem:[#allocation4 + $0x8] sm:$0xf]
    %v71 = vld [vmem:[#allocation4 + $0xc] sm:$0xf]
    %v72 = vld [vmem:[#allocation7] sm:$0xf]
    %v73 = vld [vmem:[#allocation7 + $0x4] sm:$0xf]
    %v74 = vld [vmem:[#allocation7 + $0x8] sm:$0xf]
    %v75 = vld [vmem:[#allocation7 + $0xc] sm:$0xf]
    %v76 = vld [vmem:[#allocation7 + $0x10] sm:$0xf]
    %v77 = vld [vmem:[#allocation7 + $0x14] sm:$0xf]
    %v78 = vld [vmem:[#allocation7 + $0x18] sm:$0xf]
    %v79 = vld [vmem:[#allocation7 + $0x1c] sm:$0xf]
    %v80 = vld [vmem:[#allocation7 + $0x20] sm:$0xf]
    %v81 = vld [vmem:[#allocation7 + $0x24] sm:$0xf]
    %v82 = vld [vmem:[#allocation7 + $0x28] sm:$0xf]
    %v83 = vld [vmem:[#allocation7 + $0x2c] sm:$0xf]
    %v84 = vld [vmem:[#allocation7 + $0x30] sm:$0xf]
    %v85 = vld [vmem:[#allocation7 + $0x34] sm:$0xf]
    %v86 = vld [vmem:[#allocation7 + $0x38] sm:$0xf]
    %v87 = vld [vmem:[#allocation7 + $0x3c] sm:$0xf]
    %v92 = vunpack.c.l.b16 %v68
    %v93 = vunpack.c.l.b16 %v69
    %v94 = vunpack.c.l.b16 %v70
    %v95 = vunpack.c.l.b16 %v71
    %v96 = vpack.c.b16 %v93, %v92
    %v97 = vpack.c.b16 %v95, %v94
    %v116 = vunpack.c.l.b16 %v72
    %v117 = vunpack.c.l.b16 %v73
    %v118 = vunpack.c.l.b16 %v74
    %v119 = vunpack.c.l.b16 %v75
    %v120 = vunpack.c.l.b16 %v76
    %v121 = vunpack.c.l.b16 %v77
    %v122 = vunpack.c.l.b16 %v78
    %v123 = vunpack.c.l.b16 %v79
    %v124 = vunpack.c.l.b16 %v80
    %v125 = vunpack.c.l.b16 %v81
    %v126 = vunpack.c.l.b16 %v82
    %v127 = vunpack.c.l.b16 %v83
    %v128 = vunpack.c.l.b16 %v84
    %v129 = vunpack.c.l.b16 %v85
    %v130 = vunpack.c.l.b16 %v86
    %v131 = vunpack.c.l.b16 %v87
    %v132 = vpack.c.b16 %v117, %v116
    %v133 = vpack.c.b16 %v119, %v118
    %v134 = vpack.c.b16 %v121, %v120
    %v135 = vpack.c.b16 %v123, %v122
    %v136 = vpack.c.b16 %v125, %v124
    %v137 = vpack.c.b16 %v127, %v126
    %v138 = vpack.c.b16 %v129, %v128
    %v139 = vpack.c.b16 %v131, %v130
    %148 = vmatprep.subr.bf16.mxu0 0
    %149 = vmatpush1.bf16.msra.mxu0 %v132
    %150 = vmatprep.subr.bf16.mxu0 0
    %151 = vmatpush1.bf16.msra.mxu0 %v133
    %152 = vmatprep.subr.bf16.mxu0 0
    %153 = vmatpush1.bf16.msra.mxu0 %v134
    %154 = vmatprep.subr.bf16.mxu0 0
    %155 = vmatpush1.bf16.msra.mxu0 %v135
    %156 = vmatprep.subr.bf16.mxu0 0
    %157 = vmatpush1.bf16.msra.mxu0 %v136
    %158 = vmatprep.subr.bf16.mxu0 0
    %159 = vmatpush1.bf16.msra.mxu0 %v137
    %160 = vmatprep.subr.bf16.mxu0 0
    %161 = vmatpush1.bf16.msra.mxu0 %v138
    %162 = vmatprep.subr.bf16.mxu0 0
    %163 = vmatpush1.bf16.msra.mxu0 %v139
    %164 = vmatprep.subr.bf16.mxu0 0
    %165 = vmatpush1.bf16.msra.mxu0 0
    %166 = vmatprep.subr.bf16.mxu0 0
    %167 = vmatpush1.bf16.msra.mxu0 0
    %168 = vmatprep.subr.bf16.mxu0 0
    %169 = vmatpush1.bf16.msra.mxu0 0
    %170 = vmatprep.subr.bf16.mxu0 0
    %171 = vmatpush1.bf16.msra.mxu0 0
    %172 = vmatprep.subr.bf16.mxu0 0
    %173 = vmatpush1.bf16.msra.mxu0 0
    %174 = vmatprep.subr.bf16.mxu0 0
    %175 = vmatpush1.bf16.msra.mxu0 0
    %176 = vmatprep.subr.bf16.mxu0 0
    %177 = vmatpush1.bf16.msra.mxu0 0
    %178 = vmatprep.subr.bf16.mxu0 0
    %179 = vmatpush1.bf16.msra.mxu0 0
    %180 = vmatprep.mubr.bf16.mxu0 0
    %181 = vmatmul.mubr.bf16.gmra.mrb[0].mxu0 %v96
    %v182 = vpop.f32.mrb[0].mxu0
    %v183 = vadd.f32 0.0, %v182
    %v184 = vpop.f32.mrb[0].mxu0
    %v185 = vpop.f32.mrb[0].mxu0
    %v186 = vadd.f32 0.0, %v185
    %v187 = vpop.f32.mrb[0].mxu0
    %188 = vmatprep.mubr.bf16.mxu0 0
    %189 = vmatmul.mubr.bf16.gmra.mrb[0].mxu0 %v97
    %v190 = vpop.f32.mrb[0].mxu0
    %v191 = vadd.f32 0.0, %v190
    %v192 = vpop.f32.mrb[0].mxu0
    %v193 = vpop.f32.mrb[0].mxu0
    %v194 = vadd.f32 0.0, %v193
    %v195 = vpop.f32.mrb[0].mxu0
    %196 = vdwg.mxu0
    %v197 = vld [vmem:[#allocation9] sm:$0xf]
    %v198 = vld [vmem:[#allocation9 + $0x4] sm:$0xf]
    %v199 = vld [vmem:[#allocation9 + $0x8] sm:$0xf]
    %v200 = vld [vmem:[#allocation9 + $0xc] sm:$0xf]
    %v201 = vld [vmem:[#allocation9 + $0x10] sm:$0xf]
    %v202 = vld [vmem:[#allocation9 + $0x14] sm:$0xf]
    %v203 = vld [vmem:[#allocation9 + $0x18] sm:$0xf]
    %v204 = vld [vmem:[#allocation9 + $0x1c] sm:$0xf]
    %v205 = vld [vmem:[#allocation9 + $0x20] sm:$0xf]
    %v206 = vld [vmem:[#allocation9 + $0x24] sm:$0xf]
    %v207 = vld [vmem:[#allocation9 + $0x28] sm:$0xf]
    %v208 = vld [vmem:[#allocation9 + $0x2c] sm:$0xf]
    %v209 = vld [vmem:[#allocation9 + $0x30] sm:$0xf]
    %v210 = vld [vmem:[#allocation9 + $0x34] sm:$0xf]
    %v211 = vld [vmem:[#allocation9 + $0x38] sm:$0xf]
    %v212 = vld [vmem:[#allocation9 + $0x3c] sm:$0xf]
    %v229 = vunpack.c.l.b16 %v197
    %v230 = vunpack.c.l.b16 %v198
    %v231 = vunpack.c.l.b16 %v199
    %v232 = vunpack.c.l.b16 %v200
    %v233 = vunpack.c.l.b16 %v201
    %v234 = vunpack.c.l.b16 %v202
    %v235 = vunpack.c.l.b16 %v203
    %v236 = vunpack.c.l.b16 %v204
    %v237 = vunpack.c.l.b16 %v205
    %v238 = vunpack.c.l.b16 %v206
    %v239 = vunpack.c.l.b16 %v207
    %v240 = vunpack.c.l.b16 %v208
    %v241 = vunpack.c.l.b16 %v209
    %v242 = vunpack.c.l.b16 %v210
    %v243 = vunpack.c.l.b16 %v211
    %v244 = vunpack.c.l.b16 %v212
    %v245 = vpack.c.b16 %v230, %v229
    %v246 = vpack.c.b16 %v232, %v231
    %v247 = vpack.c.b16 %v234, %v233
    %v248 = vpack.c.b16 %v236, %v235
    %v249 = vpack.c.b16 %v238, %v237
    %v250 = vpack.c.b16 %v240, %v239
    %v251 = vpack.c.b16 %v242, %v241
    %v252 = vpack.c.b16 %v244, %v243
    %261 = vmatprep.subr.bf16.mxu0 0
    %262 = vmatpush1.bf16.msra.mxu0 %v245
    %263 = vmatprep.subr.bf16.mxu0 0
    %264 = vmatpush1.bf16.msra.mxu0 %v246
    %265 = vmatprep.subr.bf16.mxu0 0
    %266 = vmatpush1.bf16.msra.mxu0 %v247
    %267 = vmatprep.subr.bf16.mxu0 0
    %268 = vmatpush1.bf16.msra.mxu0 %v248
    %269 = vmatprep.subr.bf16.mxu0 0
    %270 = vmatpush1.bf16.msra.mxu0 %v249
    %271 = vmatprep.subr.bf16.mxu0 0
    %272 = vmatpush1.bf16.msra.mxu0 %v250
    %273 = vmatprep.subr.bf16.mxu0 0
    %274 = vmatpush1.bf16.msra.mxu0 %v251
    %275 = vmatprep.subr.bf16.mxu0 0
    %276 = vmatpush1.bf16.msra.mxu0 %v252
    %277 = vmatprep.subr.bf16.mxu0 0
    %278 = vmatpush1.bf16.msra.mxu0 0
    %279 = vmatprep.subr.bf16.mxu0 0
    %280 = vmatpush1.bf16.msra.mxu0 0
    %281 = vmatprep.subr.bf16.mxu0 0
    %282 = vmatpush1.bf16.msra.mxu0 0
    %283 = vmatprep.subr.bf16.mxu0 0
    %284 = vmatpush1.bf16.msra.mxu0 0
    %285 = vmatprep.subr.bf16.mxu0 0
    %286 = vmatpush1.bf16.msra.mxu0 0
    %287 = vmatprep.subr.bf16.mxu0 0
    %288 = vmatpush1.bf16.msra.mxu0 0
    %289 = vmatprep.subr.bf16.mxu0 0
    %290 = vmatpush1.bf16.msra.mxu0 0
    %291 = vmatprep.subr.bf16.mxu0 0
    %292 = vmatpush1.bf16.msra.mxu0 0
    %293 = vmatprep.mubr.bf16.mxu0 0
    %294 = vmatmul.mubr.bf16.gmra.mrb[0].mxu0 %v96
    %v295 = vpop.f32.mrb[0].mxu0
    %v296 = vadd.f32 0.0, %v295
    %v297 = vpop.f32.mrb[0].mxu0
    %v298 = vpop.f32.mrb[0].mxu0
    %v299 = vadd.f32 0.0, %v298
    %v300 = vpop.f32.mrb[0].mxu0
    %301 = vmatprep.mubr.bf16.mxu0 0
    %302 = vmatmul.mubr.bf16.gmra.mrb[0].mxu0 %v97
    %v303 = vpop.f32.mrb[0].mxu0
    %v304 = vadd.f32 0.0, %v303
    %v305 = vpop.f32.mrb[0].mxu0
    %v306 = vpop.f32.mrb[0].mxu0
    %v307 = vadd.f32 0.0, %v306
    %v308 = vpop.f32.mrb[0].mxu0
    %309 = vdwg.mxu0
    %v310 = vld [vmem:[#allocation2] sm:$0xff]
    %v311 = vld [vmem:[#allocation2 + $0x8] sm:$0xff]
    %v312 = vsub.f32 %v183, %v304
    %v313 = vsub.f32 %v186, %v307
    %v314 = vadd.f32 %v310, %v312
    %v315 = vadd.f32 %v311, %v313
    %316 = vst [vmem:[#allocation2] sm:$0xff] %v314
    %317 = vst [vmem:[#allocation2 + $0x8] sm:$0xff] %v315
    %v318 = vld [vmem:[#allocation3] sm:$0xff]
    %v319 = vld [vmem:[#allocation3 + $0x8] sm:$0xff]
    %v320 = vadd.f32 %v191, %v296
    %v321 = vadd.f32 %v194, %v299
    %v322 = vadd.f32 %v318, %v320
    %v323 = vadd.f32 %v319, %v321
    %324 = vst [vmem:[#allocation3] sm:$0xff] %v322
    %325 = vst [vmem:[#allocation3 + $0x8] sm:$0xff] %v323
    // Predicated region
    $region34: #{tpu_custom_call.1} parent=1 // pred_check
      %p326 = pneg %p60
    $region35: #{tpu_custom_call.1} parent=1 // pred_check_branch
      %328 = sbr.rel (%p326) target = $region37
    $region36: #{tpu_custom_call.1} parent=1 // pred_region
      %v329 = vld [vmem:[#allocation2] sm:$0xff]
      %v330 = vld [vmem:[#allocation2 + $0x8] sm:$0xff]
      %v331 = vld [vmem:[%s3] sm:$0x1]
      %v333 = vlaneseq
      %v334 = vshrl.u32 %v333, 7
      %v335 = vsub.s32 0, %v334
      %v336 = vrot.slane %v331, %v335
      %v338 = vadd.f32 %v329, %v336
      %v339 = vadd.f32 %v330, %v336
      %340 = vst [vmem:[#allocation10] sm:$0xff] %v338
      %341 = vst [vmem:[#allocation10 + $0x8] sm:$0xff] %v339
      %v342 = vld [vmem:[#allocation3] sm:$0xff]
      %v343 = vld [vmem:[#allocation3 + $0x8] sm:$0xff]
      %s344 = scalar_lea.vmem %s3, 1
      %v345 = vld [vmem:[%s344] sm:$0x1]
      %v347 = vlaneseq
      %v348 = vshrl.u32 %v347, 7
      %v349 = vsub.s32 0, %v348
      %v350 = vrot.slane %v345, %v349
      %v352 = vadd.f32 %v342, %v350
      %v353 = vadd.f32 %v343, %v350
      %s354 = scalar_lea.vmem [#allocation10], 16
      %355 = vst [vmem:[%s354] sm:$0xff] %v352
      %356 = vst [vmem:[%s354 + $0x8] sm:$0xff] %v353
    $region37: #{tpu_custom_call.1} parent=1 // pred_fallthru
      _
    // Predicated region
    $region38: #{tpu_custom_call.1} parent=1 // pred_check
      _
    $region39: #{tpu_custom_call.1} parent=1 // pred_check_branch
      %358 = sbr.rel (0) target = $region41
    $region40: #{tpu_custom_call.1} parent=1 // pred_region
      %s360 = ssub.s32 512, 512
      %361 = vsyncadd [#allocation6], %s360
      %s362 = sshll.u32 [#allocation10], 4
      %s363 = int_to_ptr.vmem [resolvable:$true] %s362
      %368 = dma.vmem_to_hbm [thread:$0]  %s363, 512, %s4, [#allocation6], 128, 128, 8
    $region41: #{tpu_custom_call.1} parent=1 // pred_fallthru
      _
    // Predicated region
    $region42: #{tpu_custom_call.1} parent=1 // pred_check
      _
    $region43: #{tpu_custom_call.1} parent=1 // pred_check_branch
      %370 = sbr.rel (0) target = $region45
    $region44: #{tpu_custom_call.1} parent=1 // pred_region
      %371 = dma.done [#allocation6], 512
    $region45: #{tpu_custom_call.1} parent=1 // pred_fallthru
      _
    %372 = vsyncpa [#allocation5], 1
    %373 = vsyncpa [#allocation8], 1
    %374 = vsyncpa [#allocation6], 1

</llo_original>
